<compile_context>
chip_gen: v7x
topology: tpu7x:2x2x1
jax: 0.10.0
libtpu: 0.0.40
codegen_flags: <defaults>
</compile_context>

<pallas_src>
import jax
import jax.numpy as jnp
from jax.experimental import pallas as pl
from jax.experimental.pallas import tpu as pltpu


def mlp_kernel(p_ref, x_ref, o_ref):
    """p_ref: SMEM (17,) f32 packed params; x_ref: VMEM (2, Bt); o_ref: VMEM (1, Bt).

    Packed param layout:
      p[0:4]   = w1[0, :]   (weights for input feature 0, 4 hidden units)
      p[4:8]   = w1[1, :]   (weights for input feature 1)
      p[8:12]  = b1[:]
      p[12:16] = w2[:, 0]
      p[16]    = b2
    """
    x0 = x_ref[0:1, :]                       # (1, Bt) — input feature 0 across lanes
    x1 = x_ref[1:2, :]                       # (1, Bt) — input feature 1 across lanes

    y = jnp.zeros_like(x0)
    # Unrolled over the 4 hidden units: pure VPU broadcast-multiply-adds + ReLU.
    for j in range(4):
        h = p_ref[j] * x0 + p_ref[4 + j] * x1 + p_ref[8 + j]
        h = jnp.maximum(h, 0.0)
        y = y + p_ref[12 + j] * h
    y = y + p_ref[16]

    o_ref[...] = y.astype(o_ref.dtype)       # lane-dense (1, Bt) store


def mlp_forward(x, packed_params, *, block_b=1024):
    """x: (B, 2) float32 -> returns (B,) float32."""
    B = x.shape[0]

    # Lane-dense tile along batch: multiple of 128, capped at block_b.
    bt = min(block_b, pl.cdiv(B, 128) * 128)
    b_pad = pl.cdiv(B, bt) * bt

    # Feature-major layout: (2, B), zero-padded along batch to a multiple of bt.
    x_t = x.T
    if b_pad != B:
        x_t = jnp.pad(x_t, ((0, 0), (0, b_pad - B)))

    grid = (b_pad // bt,)

    out = pl.pallas_call(
        mlp_kernel,
        out_shape=jax.ShapeDtypeStruct((1, b_pad), jnp.float32),
        grid=grid,
        in_specs=[
            # 17 scalars, whole array in SMEM (no per-step tiling / DMA churn).
            pl.BlockSpec(memory_space=pltpu.MemorySpace.SMEM),
            # (2, bt) blocks: sublane dim (2) == full array dim, lane dim multiple of 128.
            pl.BlockSpec((2, bt), lambda i: (0, i)),
        ],
        out_specs=pl.BlockSpec((1, bt), lambda i: (0, i)),
        compiler_params=pltpu.CompilerParams(
            dimension_semantics=("parallel",),
        ),
        cost_estimate=pl.CostEstimate(
            flops=25 * b_pad,          # ~25 FMAs/adds per batch element
            transcendentals=0,
            bytes_accessed=12 * b_pad,  # 2 f32 in + 1 f32 out per element
        ),
    )(packed_params, x_t)

    return out[0, :B]                         # (B,)


def model_forward(sample, packed_params):
    """Mirrors Model.forward: sample is a dict with 'input' (and maybe 'label')."""
    x = sample["input"]
    y = mlp_forward(x, packed_params)         # (B,)
    if "label" in sample:
        sample["output"] = y.reshape(sample["label"].shape)
    else:
        sample["output"] = y                  # already squeezed: (B,)
    return sample


def pack_params(w1, b1, w2, b2):
    """w1: (2,4), b1: (4,), w2: (4,1), b2: (1,) -> packed (17,) f32."""
    return jnp.concatenate([
        w1.reshape(-1),       # row-major: w1[0,:] then w1[1,:]
        b1.reshape(-1),
        w2.reshape(-1),       # w2[:,0]
        b2.reshape(-1),
    ]).astype(jnp.float32)


def init_params(key):
    """Deterministic init mimicking torch.nn.Linear default (uniform ±1/sqrt(fan_in))."""
    k1, k2, k3, k4 = jax.random.split(key, 4)
    bound1 = 1.0 / jnp.sqrt(2.0)   # fan_in = 2
    bound2 = 1.0 / jnp.sqrt(4.0)   # fan_in = 4
    w1 = jax.random.uniform(k1, (2, 4), jnp.float32, -bound1, bound1)
    b1 = jax.random.uniform(k2, (4,), jnp.float32, -bound1, bound1)
    w2 = jax.random.uniform(k3, (4, 1), jnp.float32, -bound2, bound2)
    b2 = jax.random.uniform(k4, (1,), jnp.float32, -bound2, bound2)
    return w1, b1, w2, b2


if __name__ == "__main__":
    key = jax.random.PRNGKey(0)
    pkey, xkey = jax.random.split(key)
    w1, b1, w2, b2 = init_params(pkey)
    packed = pack_params(w1, b1, w2, b2)

    B = 8
    x = jax.random.normal(xkey, (B, 2), jnp.float32)

    # Path 1: no label -> squeezed output of shape (B,)
    sample = {"input": x}
    out_sample = model_forward(sample, packed)
    y = jax.block_until_ready(out_sample["output"])

    # Pure-JAX reference
    ref = jnp.squeeze(jnp.maximum(x @ w1 + b1, 0.0) @ w2 + b2)
    assert y.shape == (B,)
    assert jnp.allclose(y, ref, atol=1e-5, rtol=1e-5)

    # Path 2: with label -> output reshaped like the label
    label = jnp.zeros((B, 1), jnp.float32)
    sample2 = {"input": x, "label": label}
    out_sample2 = model_forward(sample2, packed)
    y2 = jax.block_until_ready(out_sample2["output"])
    assert y2.shape == label.shape
    assert jnp.allclose(y2.reshape(-1), ref, atol=1e-5, rtol=1e-5)

    print("KERNEL_OK")
</pallas_src>

<mosaic_0001>
module attributes {stable_mosaic.version = 11 : i64} {
  func.func @mlp_kernel(%arg0: i32, %arg1: memref<17xf32, #tpu.memory_space<smem>>, %arg2: memref<2x128xf32, #tpu.memory_space<vmem>>, %arg3: memref<1x128xf32, #tpu.memory_space<vmem>>) attributes {dimension_semantics = [#tpu.dimension_semantics<parallel>], iteration_bounds = array<i64: 1>, scalar_prefetch = 0 : i64, scratch_operands = 0 : i64, tpu.core_type = #tpu.core_type<tc>, window_params = [{transform_indices = @transform_0, window_bounds = array<i64: 17>}, {transform_indices = @transform_1, window_bounds = array<i64: 2, 128>}, {transform_indices = @transform_2, window_bounds = array<i64: 1, 128>}]} {
    %c0 = arith.constant 0 : index
    %c0_0 = arith.constant 0 : index
    %0 = vector.load %arg2[%c0, %c0_0] : memref<2x128xf32, #tpu.memory_space<vmem>>, vector<1x128xf32>
    %c1 = arith.constant 1 : index
    %c0_1 = arith.constant 0 : index
    %1 = vector.load %arg2[%c1, %c0_1] : memref<2x128xf32, #tpu.memory_space<vmem>>, vector<1x128xf32>
    %cst = arith.constant 0.000000e+00 : f32
    %2 = vector.broadcast %cst : f32 to vector<1x128xf32>
    %c0_2 = arith.constant 0 : index
    %3 = memref.load %arg1[%c0_2] : memref<17xf32, #tpu.memory_space<smem>>
    %4 = vector.broadcast %3 : f32 to vector<1x128xf32>
    %5 = arith.mulf %4, %0 : vector<1x128xf32>
    %c4 = arith.constant 4 : index
    %6 = memref.load %arg1[%c4] : memref<17xf32, #tpu.memory_space<smem>>
    %7 = vector.broadcast %6 : f32 to vector<1x128xf32>
    %8 = arith.mulf %7, %1 : vector<1x128xf32>
    %9 = arith.addf %5, %8 : vector<1x128xf32>
    %c8 = arith.constant 8 : index
    %10 = memref.load %arg1[%c8] : memref<17xf32, #tpu.memory_space<smem>>
    %11 = vector.broadcast %10 : f32 to vector<1x128xf32>
    %12 = arith.addf %9, %11 : vector<1x128xf32>
    %cst_3 = arith.constant 0.000000e+00 : f32
    %13 = vector.broadcast %cst_3 : f32 to vector<1x128xf32>
    %14 = arith.maximumf %12, %13 : vector<1x128xf32>
    %c12 = arith.constant 12 : index
    %15 = memref.load %arg1[%c12] : memref<17xf32, #tpu.memory_space<smem>>
    %16 = vector.broadcast %15 : f32 to vector<1x128xf32>
    %17 = arith.mulf %16, %14 : vector<1x128xf32>
    %18 = arith.addf %2, %17 : vector<1x128xf32>
    %c1_4 = arith.constant 1 : index
    %19 = memref.load %arg1[%c1_4] : memref<17xf32, #tpu.memory_space<smem>>
    %20 = vector.broadcast %19 : f32 to vector<1x128xf32>
    %21 = arith.mulf %20, %0 : vector<1x128xf32>
    %c5 = arith.constant 5 : index
    %22 = memref.load %arg1[%c5] : memref<17xf32, #tpu.memory_space<smem>>
    %23 = vector.broadcast %22 : f32 to vector<1x128xf32>
    %24 = arith.mulf %23, %1 : vector<1x128xf32>
    %25 = arith.addf %21, %24 : vector<1x128xf32>
    %c9 = arith.constant 9 : index
    %26 = memref.load %arg1[%c9] : memref<17xf32, #tpu.memory_space<smem>>
    %27 = vector.broadcast %26 : f32 to vector<1x128xf32>
    %28 = arith.addf %25, %27 : vector<1x128xf32>
    %cst_5 = arith.constant 0.000000e+00 : f32
    %29 = vector.broadcast %cst_5 : f32 to vector<1x128xf32>
    %30 = arith.maximumf %28, %29 : vector<1x128xf32>
    %c13 = arith.constant 13 : index
    %31 = memref.load %arg1[%c13] : memref<17xf32, #tpu.memory_space<smem>>
    %32 = vector.broadcast %31 : f32 to vector<1x128xf32>
    %33 = arith.mulf %32, %30 : vector<1x128xf32>
    %34 = arith.addf %18, %33 : vector<1x128xf32>
    %c2 = arith.constant 2 : index
    %35 = memref.load %arg1[%c2] : memref<17xf32, #tpu.memory_space<smem>>
    %36 = vector.broadcast %35 : f32 to vector<1x128xf32>
    %37 = arith.mulf %36, %0 : vector<1x128xf32>
    %c6 = arith.constant 6 : index
    %38 = memref.load %arg1[%c6] : memref<17xf32, #tpu.memory_space<smem>>
    %39 = vector.broadcast %38 : f32 to vector<1x128xf32>
    %40 = arith.mulf %39, %1 : vector<1x128xf32>
    %41 = arith.addf %37, %40 : vector<1x128xf32>
    %c10 = arith.constant 10 : index
    %42 = memref.load %arg1[%c10] : memref<17xf32, #tpu.memory_space<smem>>
    %43 = vector.broadcast %42 : f32 to vector<1x128xf32>
    %44 = arith.addf %41, %43 : vector<1x128xf32>
    %cst_6 = arith.constant 0.000000e+00 : f32
    %45 = vector.broadcast %cst_6 : f32 to vector<1x128xf32>
    %46 = arith.maximumf %44, %45 : vector<1x128xf32>
    %c14 = arith.constant 14 : index
    %47 = memref.load %arg1[%c14] : memref<17xf32, #tpu.memory_space<smem>>
    %48 = vector.broadcast %47 : f32 to vector<1x128xf32>
    %49 = arith.mulf %48, %46 : vector<1x128xf32>
    %50 = arith.addf %34, %49 : vector<1x128xf32>
    %c3 = arith.constant 3 : index
    %51 = memref.load %arg1[%c3] : memref<17xf32, #tpu.memory_space<smem>>
    %52 = vector.broadcast %51 : f32 to vector<1x128xf32>
    %53 = arith.mulf %52, %0 : vector<1x128xf32>
    %c7 = arith.constant 7 : index
    %54 = memref.load %arg1[%c7] : memref<17xf32, #tpu.memory_space<smem>>
    %55 = vector.broadcast %54 : f32 to vector<1x128xf32>
    %56 = arith.mulf %55, %1 : vector<1x128xf32>
    %57 = arith.addf %53, %56 : vector<1x128xf32>
    %c11 = arith.constant 11 : index
    %58 = memref.load %arg1[%c11] : memref<17xf32, #tpu.memory_space<smem>>
    %59 = vector.broadcast %58 : f32 to vector<1x128xf32>
    %60 = arith.addf %57, %59 : vector<1x128xf32>
    %cst_7 = arith.constant 0.000000e+00 : f32
    %61 = vector.broadcast %cst_7 : f32 to vector<1x128xf32>
    %62 = arith.maximumf %60, %61 : vector<1x128xf32>
    %c15 = arith.constant 15 : index
    %63 = memref.load %arg1[%c15] : memref<17xf32, #tpu.memory_space<smem>>
    %64 = vector.broadcast %63 : f32 to vector<1x128xf32>
    %65 = arith.mulf %64, %62 : vector<1x128xf32>
    %66 = arith.addf %50, %65 : vector<1x128xf32>
    %c16 = arith.constant 16 : index
    %67 = memref.load %arg1[%c16] : memref<17xf32, #tpu.memory_space<smem>>
    %68 = vector.broadcast %67 : f32 to vector<1x128xf32>
    %69 = arith.addf %66, %68 : vector<1x128xf32>
    %c0_8 = arith.constant 0 : index
    %c0_9 = arith.constant 0 : index
    %70 = vector.load %arg3[%c0_8, %c0_9] : memref<1x128xf32, #tpu.memory_space<vmem>>, vector<1x128xf32>
    tpu.vector_store %arg3[%c0_8, %c0_9], %69 {strides = array<i32>} : memref<1x128xf32, #tpu.memory_space<vmem>>, vector<1x128xf32>,
    return
  }
  func.func @transform_0(%arg0: i32) -> i32 {
    %c0_i32 = arith.constant 0 : i32
    %c0_i32_0 = arith.constant 0 : i32
    return %c0_i32 : i32
  }
  func.func @transform_1(%arg0: i32) -> (i32, i32) {
    %c0_i32 = arith.constant 0 : i32
    %c0_i32_0 = arith.constant 0 : i32
    return %c0_i32, %arg0 : i32, i32
  }
  func.func @transform_2(%arg0: i32) -> (i32, i32) {
    %c0_i32 = arith.constant 0 : i32
    %c0_i32_0 = arith.constant 0 : i32
    return %c0_i32, %arg0 : i32, i32
  }
}

</mosaic_0001>

<llo_original>
// kernel: tpu_custom_call.1
$region0: #{tpu_custom_call.1}
  #allocation0 [shape = 'u32[]', space=smem, size = 0x4, offset = 0x4, fixed_abs, tag = 'smem constant byte address 0x4 - core index']
  #allocation1 [shape = 'u32[144,128]{1,0:T(1,128)}', space=vmem, size = 0x12000, scoped, tag = 'internal scratch']
  %s0 = inlined_call_operand.hbm [shape: f32[17], index: 0, kind: input, shape index: {}]
  %s1 = inlined_call_operand.vmem [shape: f32[2,128], index: 1, kind: input, shape index: {}]
  %s2 = inlined_call_operand.hbm [shape: f32[1,128], index: 2, kind: output, shape index: {}]
  %s3 = sld [smem:[#allocation0]]
  $region22: #{tpu_custom_call.1} parent=0
    _
  %s5 = ssub.s32 1, %s3
  %s6 = scalar_select 0, %s5, %s3
  $region1: #{tpu_custom_call.1} parent=0
    #allocation2 [shape = 'u8[512]{0}', space=smem, size = 0x200, scoped, tag = 'input window, operand 0, single buffered']
    #allocation3 [shape = 's32[1]{0}', space=sflag, size = 0x4, scoped, tag = 'scoped memory for tpu_custom_call.1']
    #allocation4 [shape = 's32[1]{0}', space=sflag, size = 0x4, scoped, tag = 'scoped memory for tpu_custom_call.1']
    #allocation5 [shape = 'u8[512]{0}', space=vmem, size = 0x400, scoped, tag = 'output window, operand 0, single buffered']
    %7 = vsyncpa [#allocation4], 0
    %8 = vsyncpa [#allocation3], 0
    // Predicated region
    $region2: #{tpu_custom_call.1} parent=1 // pred_check
      _
    $region3: #{tpu_custom_call.1} parent=1 // pred_check_branch
      %10 = sbr.rel (0) target = $region5
    $region4: #{tpu_custom_call.1} parent=1 // pred_region
      %s12 = ssub.s32 16, 16
      %13 = vsyncadd [#allocation4], %s12
      %16 = dma.hbm_to_smem %s0, 16, [#allocation2], [#allocation4]
    $region5: #{tpu_custom_call.1} parent=1 // pred_fallthru
      _
    // Predicated region
    $region6: #{tpu_custom_call.1} parent=1 // pred_check
      _
    $region7: #{tpu_custom_call.1} parent=1 // pred_check_branch
      %18 = sbr.rel (0) target = $region9
    $region8: #{tpu_custom_call.1} parent=1 // pred_region
      _
    $region9: #{tpu_custom_call.1} parent=1 // pred_fallthru
      _
    // Predicated region
    $region10: #{tpu_custom_call.1} parent=1 // pred_check
      _
    $region11: #{tpu_custom_call.1} parent=1 // pred_check_branch
      %20 = sbr.rel (0) target = $region13
    $region12: #{tpu_custom_call.1} parent=1 // pred_region
      %21 = dma.done [#allocation4], 16
    $region13: #{tpu_custom_call.1} parent=1 // pred_fallthru
      _
    %22 = sfence
    %v23 = vld [vmem:[%s1] sm:$0x1]
    %v24 = vld [vmem:[%s1 + $0x1] sm:$0x1]
    %s25 = sld [smem:[#allocation2]]
    %v26 = vstv %s25
    %v27 = vmul.f32 %v26, %v23
    %s28 = sld [smem:[#allocation2 + $0x4]]
    %v29 = vstv %s28
    %v30 = vmul.f32 %v29, %v24
    %v31 = vadd.f32 %v27, %v30
    %s32 = sld [smem:[#allocation2 + $0x8]]
    %v33 = vstv %s32
    %v34 = vadd.f32 %v31, %v33
    %v35 = vmax.f32 %v34, 0.0
    %s36 = sld [smem:[#allocation2 + $0xc]]
    %v37 = vstv %s36
    %v38 = vmul.f32 %v37, %v35
    %v39 = vadd.f32 %v38, 0.0
    %s40 = sld [smem:[#allocation2 + $0x1]]
    %v41 = vstv %s40
    %v42 = vmul.f32 %v41, %v23
    %s43 = sld [smem:[#allocation2 + $0x5]]
    %v44 = vstv %s43
    %v45 = vmul.f32 %v44, %v24
    %v46 = vadd.f32 %v42, %v45
    %s47 = sld [smem:[#allocation2 + $0x9]]
    %v48 = vstv %s47
    %v49 = vadd.f32 %v46, %v48
    %v50 = vmax.f32 %v49, 0.0
    %s51 = sld [smem:[#allocation2 + $0xd]]
    %v52 = vstv %s51
    %v53 = vmul.f32 %v52, %v50
    %v54 = vadd.f32 %v39, %v53
    %s55 = sld [smem:[#allocation2 + $0x2]]
    %v56 = vstv %s55
    %v57 = vmul.f32 %v56, %v23
    %s58 = sld [smem:[#allocation2 + $0x6]]
    %v59 = vstv %s58
    %v60 = vmul.f32 %v59, %v24
    %v61 = vadd.f32 %v57, %v60
    %s62 = sld [smem:[#allocation2 + $0xa]]
    %v63 = vstv %s62
    %v64 = vadd.f32 %v61, %v63
    %v65 = vmax.f32 %v64, 0.0
    %s66 = sld [smem:[#allocation2 + $0xe]]
    %v67 = vstv %s66
    %v68 = vmul.f32 %v67, %v65
    %v69 = vadd.f32 %v54, %v68
    %s70 = sld [smem:[#allocation2 + $0x3]]
    %v71 = vstv %s70
    %v72 = vmul.f32 %v71, %v23
    %s73 = sld [smem:[#allocation2 + $0x7]]
    %v74 = vstv %s73
    %v75 = vmul.f32 %v74, %v24
    %v76 = vadd.f32 %v72, %v75
    %s77 = sld [smem:[#allocation2 + $0xb]]
    %v78 = vstv %s77
    %v79 = vadd.f32 %v76, %v78
    %v80 = vmax.f32 %v79, 0.0
    %s81 = sld [smem:[#allocation2 + $0xf]]
    %v82 = vstv %s81
    %v83 = vmul.f32 %v82, %v80
    %v84 = vadd.f32 %v69, %v83
    %s85 = sld [smem:[#allocation2 + $0x10]]
    %v86 = vstv %s85
    %v87 = vadd.f32 %v84, %v86
    %88 = vst [vmem:[#allocation5] sm:$0x1] %v87
    // Predicated region
    $region14: #{tpu_custom_call.1} parent=1 // pred_check
      _
    $region15: #{tpu_custom_call.1} parent=1 // pred_check_branch
      %90 = sbr.rel (0) target = $region17
    $region16: #{tpu_custom_call.1} parent=1 // pred_region
      %s92 = ssub.s32 16, 16
      %93 = vsyncadd [#allocation3], %s92
      %s95 = sshll.u32 [#allocation5], 4
      %s96 = int_to_ptr.vmem [resolvable:$true] %s95
      %98 = dma.vmem_to_hbm [thread:$0]  %s96, 16, %s2, [#allocation3]
    $region17: #{tpu_custom_call.1} parent=1 // pred_fallthru
      _
    // Predicated region
    $region18: #{tpu_custom_call.1} parent=1 // pred_check
      _
    $region19: #{tpu_custom_call.1} parent=1 // pred_check_branch
      %100 = sbr.rel (0) target = $region21
    $region20: #{tpu_custom_call.1} parent=1 // pred_region
      %101 = dma.done [#allocation3], 16
    $region21: #{tpu_custom_call.1} parent=1 // pred_fallthru
      _
    %102 = vsyncpa [#allocation3], 1
    %103 = vsyncpa [#allocation4], 1

</llo_original>
